<compile_context>
chip_gen: v6e
topology: v6e:2x2x1
jax: 0.10.0
libtpu: 0.0.40
codegen_flags: <defaults>
</compile_context>

<pallas_src>
import jax
import jax.numpy as jnp
from jax.experimental import pallas as pl
from jax.experimental.pallas import tpu as pltpu

_LANE = 128
_LT_MAX = 8192          # max lane-tile width per grid step
_ELEM_BUDGET = 1 << 16  # target elements per (Bt, Lt) tile per input array


def _round_up(x, m):
    return ((x + m - 1) // m) * m


def _focal_terms(x, y, gamma, eps):
    """Elementwise focal-loss terms; gamma specialized at trace time."""
    log_x = jnp.log(x + eps)
    log_1mx = jnp.log((1.0 - x) + eps)
    if gamma == 0.0:
        return -(y * log_x + (1.0 - y) * log_1mx)
    if gamma == 1.0:
        return -((1.0 - x) * y * log_x + x * (1.0 - y) * log_1mx)
    if gamma == 2.0:
        omx = 1.0 - x
        return -(omx * omx * y * log_x + x * x * (1.0 - y) * log_1mx)
    # generic gamma: falls back to pow (2 extra EUP transcendentals each)
    return -(jnp.power(1.0 - x, gamma) * y * log_x
             + jnp.power(x, gamma) * (1.0 - y) * log_1mx)


def _make_kernel(*, M, Lt, gamma, eps, m_pow2):
    n_lane_tiles = Lt // _LANE

    def _fold(term):
        # (Bt, Lt) -> (Bt, 128): pure VPU adds over static 128-lane slices.
        acc = term[:, 0:_LANE]
        for t in range(1, n_lane_tiles):
            acc = acc + term[:, t * _LANE:(t + 1) * _LANE]
        return acc

    def _accumulate(pred_raw, gt_raw, valid, out_ref, j):
        @pl.when(j == 0)
        def _():
            out_ref[...] = jnp.zeros_like(out_ref)

        x = pred_raw.astype(jnp.float32)
        y = gt_raw.astype(jnp.float32)
        term = jnp.where(valid, _focal_terms(x, y, gamma, eps), 0.0)
        out_ref[...] += _fold(term)[None, :, :]

    if m_pow2:
        shift = int(M).bit_length() - 1
        low_mask = M - 1

        def kernel(src_ref, tgt_ref, pred_ref, gt_ref, out_ref):
            j = pl.program_id(1)
            pred_raw = pred_ref[...]                       # (Bt, Lt)
            flat = (jax.lax.broadcasted_iota(jnp.int32, pred_raw.shape, 1)
                    + j * Lt)
            row = flat >> shift                            # flat // M
            col = flat & low_mask                          # flat %  M
            valid = (row < src_ref[...]) & (col < tgt_ref[...])
            _accumulate(pred_raw, gt_ref[...], valid, out_ref, j)

        return kernel

    def kernel(src_ref, tgt_ref, row_ref, col_ref, pred_ref, gt_ref, out_ref):
        j = pl.program_id(1)
        # row_ref/col_ref: (1, Lt) int32; src/tgt: (Bt, 1) int32 -> (Bt, Lt)
        valid = (row_ref[...] < src_ref[...]) & (col_ref[...] < tgt_ref[...])
        _accumulate(pred_ref[...], gt_ref[...], valid, out_ref, j)

    return kernel


def focal_loss(pred_perm, gt_perm, src_ns, tgt_ns,
               alpha=1.0, gamma=0.0, eps=1e-15):
    """Pallas equivalent of FocalLoss.forward. Returns a scalar f32."""
    del alpha  # accepted but unused, matching the PyTorch module's forward()
    # TODO(synk): the torch.all() range asserts on pred/gt are debug checks
    # with no cheap in-kernel equivalent; they are intentionally skipped.
    B, N, M = pred_perm.shape
    gamma = float(gamma)
    eps = float(eps)
    src_ns = src_ns.astype(jnp.int32)
    tgt_ns = tgt_ns.astype(jnp.int32)

    # --- lane-dense layout + tiling choice --------------------------------
    L = N * M
    Lp = _round_up(L, _LANE)
    if Lp > _LT_MAX:
        Lp = _round_up(Lp, _LT_MAX)
        Lt = _LT_MAX
    else:
        Lt = Lp
    if B <= 8:
        Bt = Bp = B
    else:
        bt_cap = max(8, (_ELEM_BUDGET // Lt) // 8 * 8)
        Bt = min(_round_up(B, 8), bt_cap)
        Bp = _round_up(B, Bt)

    pred2d = pred_perm.reshape(B, L)   # keep native dtype; cast in-kernel
    gt2d = gt_perm.reshape(B, L)
    if (Bp, Lp) != (B, L):
        # Padding is masked out in-kernel (padded batch rows get src_ns == 0,
        # padded lanes map to row >= N).
        pred2d = jnp.pad(pred2d, ((0, Bp - B), (0, Lp - L)))
        gt2d = jnp.pad(gt2d, ((0, Bp - B), (0, Lp - L)))
    src2d = jnp.pad(src_ns, (0, Bp - B)).reshape(Bp, 1)
    tgt2d = jnp.pad(tgt_ns, (0, Bp - B)).reshape(Bp, 1)

    nb, nl = Bp // Bt, Lp // Lt
    m_pow2 = (M & (M - 1)) == 0

    small_spec = pl.BlockSpec((Bt, 1), lambda i, j: (i, 0))
    data_spec = pl.BlockSpec((Bt, Lt), lambda i, j: (i, j))
    in_specs = [small_spec, small_spec]
    inputs = [src2d, tgt2d]
    if not m_pow2:
        flat = jnp.arange(Lp, dtype=jnp.int32)
        row_idx = (flat // M).reshape(1, Lp)
        col_idx = (flat % M).reshape(1, Lp)
        idx_spec = pl.BlockSpec((1, Lt), lambda i, j: (0, j))
        in_specs += [idx_spec, idx_spec]
        inputs += [row_idx, col_idx]
    in_specs += [data_spec, data_spec]
    inputs += [pred2d, gt2d]

    kernel = _make_kernel(M=M, Lt=Lt, gamma=gamma, eps=eps, m_pow2=m_pow2)

    partials = pl.pallas_call(
        kernel,
        out_shape=jax.ShapeDtypeStruct((nb, Bt, _LANE), jnp.float32),
        grid_spec=pltpu.PrefetchScalarGridSpec(
            num_scalar_prefetch=0,
            grid=(nb, nl),
            in_specs=in_specs,
            out_specs=pl.BlockSpec((1, Bt, _LANE), lambda i, j: (i, 0, 0)),
        ),
        compiler_params=pltpu.CompilerParams(
            dimension_semantics=("parallel", "arbitrary")),
    )(*inputs)

    # Single cross-lane reduction over the tiny partial-sum array.
    loss = jnp.sum(partials)
    n_sum = jnp.sum(src_ns.astype(jnp.float32))
    return loss / n_sum


def _reference(pred_perm, gt_perm, src_ns, tgt_ns, gamma=0.0, eps=1e-15):
    """Pure-JAX reference matching the PyTorch loop semantics."""
    B, N, M = pred_perm.shape
    x = pred_perm.astype(jnp.float32)
    y = gt_perm.astype(jnp.float32)
    row = jnp.arange(N)[None, :, None]
    col = jnp.arange(M)[None, None, :]
    mask = (row < src_ns[:, None, None]) & (col < tgt_ns[:, None, None])
    term = (-(1.0 - x) ** gamma * y * jnp.log(x + eps)
            - x ** gamma * (1.0 - y) * jnp.log(1.0 - x + eps))
    loss = jnp.sum(jnp.where(mask, term, 0.0))
    return loss / jnp.sum(src_ns.astype(jnp.float32))


if __name__ == "__main__":
    base_key = jax.random.PRNGKey(0)

    def run_case(case_id, B, N, M, gamma):
        k1, k2, k3, k4 = jax.random.split(jax.random.fold_in(base_key, case_id), 4)
        pred = jax.random.uniform(k1, (B, N, M), jnp.float32,
                                  minval=0.01, maxval=0.99)
        gt = jax.random.uniform(k2, (B, N, M), jnp.float32)  # values in [0, 1]
        src_ns = jax.random.randint(k3, (B,), 1, N + 1, dtype=jnp.int32)
        tgt_ns = jax.random.randint(k4, (B,), 1, M + 1, dtype=jnp.int32)

        out = focal_loss(pred, gt, src_ns, tgt_ns, alpha=1.0,
                         gamma=gamma, eps=1e-15)
        ref = _reference(pred, gt, src_ns, tgt_ns, gamma=gamma, eps=1e-15)
        out, ref = jax.block_until_ready((out, ref))
        assert jnp.allclose(out, ref, rtol=1e-5, atol=1e-5), \
            (case_id, B, N, M, gamma, float(out), float(ref))

    run_case(0, B=2, N=16, M=16, gamma=0.0)    # default module config, pow2 M
    run_case(1, B=2, N=16, M=16, gamma=2.0)    # specialized gamma path
    run_case(2, B=2, N=16, M=12, gamma=0.0)    # non-pow2 M + lane padding
    run_case(3, B=10, N=16, M=12, gamma=1.0)   # batch padding / wide batch tile
    run_case(4, B=2, N=96, M=96, gamma=0.5)    # multi lane-tile accumulation

    print("KERNEL_OK")
</pallas_src>

<mosaic_0001>
module attributes {stable_mosaic.version = 11 : i64} {
  func.func @kernel(%arg0: i32, %arg1: i32, %arg2: memref<2x1xi32, #tpu.memory_space<vmem>>, %arg3: memref<2x1xi32, #tpu.memory_space<vmem>>, %arg4: memref<2x256xf32, #tpu.memory_space<vmem>>, %arg5: memref<2x256xf32, #tpu.memory_space<vmem>>, %arg6: memref<1x2x128xf32, #tpu.memory_space<vmem>>) attributes {dimension_semantics = [#tpu.dimension_semantics<parallel>, #tpu.dimension_semantics<arbitrary>], iteration_bounds = array<i64: 1, 1>, scalar_prefetch = 0 : i64, scratch_operands = 0 : i64, tpu.core_type = #tpu.core_type<tc>, window_params = [{transform_indices = @transform_0, window_bounds = array<i64: 2, 1>}, {transform_indices = @transform_1, window_bounds = array<i64: 2, 1>}, {transform_indices = @transform_2, window_bounds = array<i64: 2, 256>}, {transform_indices = @transform_3, window_bounds = array<i64: 2, 256>}, {transform_indices = @transform_4, window_bounds = array<i64: 1, 2, 128>}]} {
    %c0 = arith.constant 0 : index
    %c0_0 = arith.constant 0 : index
    %0 = vector.load %arg4[%c0, %c0_0] : memref<2x256xf32, #tpu.memory_space<vmem>>, vector<2x256xf32>
    %1 = tpu.iota {dimensions = array<i32: 1>} : vector<2x256xi32>
    %c256_i32 = arith.constant 256 : i32
    %2 = arith.muli %arg1, %c256_i32 : i32
    %3 = vector.broadcast %2 : i32 to vector<2x256xi32>
    %4 = arith.addi %1, %3 : vector<2x256xi32>
    %c4_i32 = arith.constant 4 : i32
    %5 = vector.broadcast %c4_i32 : i32 to vector<2x256xi32>
    %6 = arith.shrsi %4, %5 : vector<2x256xi32>
    %c15_i32 = arith.constant 15 : i32
    %7 = vector.broadcast %c15_i32 : i32 to vector<2x256xi32>
    %8 = arith.andi %4, %7 : vector<2x256xi32>
    %c0_1 = arith.constant 0 : index
    %c0_2 = arith.constant 0 : index
    %9 = vector.load %arg2[%c0_1, %c0_2] : memref<2x1xi32, #tpu.memory_space<vmem>>, vector<2x1xi32>
    %10 = vector.broadcast %9 : vector<2x1xi32> to vector<2x256xi32>
    %11 = arith.cmpi slt, %6, %10 : vector<2x256xi32>
    %c0_3 = arith.constant 0 : index
    %c0_4 = arith.constant 0 : index
    %12 = vector.load %arg3[%c0_3, %c0_4] : memref<2x1xi32, #tpu.memory_space<vmem>>, vector<2x1xi32>
    %13 = vector.broadcast %12 : vector<2x1xi32> to vector<2x256xi32>
    %14 = arith.cmpi slt, %8, %13 : vector<2x256xi32>
    %15 = arith.andi %11, %14 : vector<2x256xi1>
    %c0_5 = arith.constant 0 : index
    %c0_6 = arith.constant 0 : index
    %16 = vector.load %arg5[%c0_5, %c0_6] : memref<2x256xf32, #tpu.memory_space<vmem>>, vector<2x256xf32>
    %c0_i32 = arith.constant 0 : i32
    %17 = arith.cmpi eq, %arg1, %c0_i32 : i32
    %18 = arith.extui %17 : i1 to i32
    %c0_i32_7 = arith.constant 0 : i32
    %19 = arith.cmpi ne, %18, %c0_i32_7 : i32
    scf.if %19 {
      %cst_19 = arith.constant 0.000000e+00 : f32
      %44 = vector.broadcast %cst_19 : f32 to vector<1x2x128xf32>
      %c0_20 = arith.constant 0 : index
      %c0_21 = arith.constant 0 : index
      %c0_22 = arith.constant 0 : index
      %45 = vector.load %arg6[%c0_20, %c0_21, %c0_22] : memref<1x2x128xf32, #tpu.memory_space<vmem>>, vector<1x2x128xf32>
      tpu.vector_store %arg6[%c0_20, %c0_21, %c0_22], %44 {strides = array<i32>} : memref<1x2x128xf32, #tpu.memory_space<vmem>>, vector<1x2x128xf32>,
    } else {
    }
    %cst = arith.constant 1.000000e-15 : f32
    %20 = vector.broadcast %cst : f32 to vector<2x256xf32>
    %21 = arith.addf %0, %20 : vector<2x256xf32>
    %22 = math.log %21 : vector<2x256xf32>
    %cst_8 = arith.constant 1.000000e+00 : f32
    %23 = vector.broadcast %cst_8 : f32 to vector<2x256xf32>
    %24 = arith.subf %23, %0 : vector<2x256xf32>
    %cst_9 = arith.constant 1.000000e-15 : f32
    %25 = vector.broadcast %cst_9 : f32 to vector<2x256xf32>
    %26 = arith.addf %24, %25 : vector<2x256xf32>
    %27 = math.log %26 : vector<2x256xf32>
    %28 = arith.mulf %16, %22 : vector<2x256xf32>
    %cst_10 = arith.constant 1.000000e+00 : f32
    %29 = vector.broadcast %cst_10 : f32 to vector<2x256xf32>
    %30 = arith.subf %29, %16 : vector<2x256xf32>
    %31 = arith.mulf %30, %27 : vector<2x256xf32>
    %32 = arith.addf %28, %31 : vector<2x256xf32>
    %cst_11 = arith.constant 0.000000e+00 : f32
    %33 = vector.broadcast %cst_11 : f32 to vector<2x256xf32>
    %34 = arith.subf %33, %32 : vector<2x256xf32>
    %cst_12 = arith.constant 0.000000e+00 : f32
    %35 = vector.broadcast %cst_12 : f32 to vector<2x256xf32>
    %36 = arith.select %15, %34, %35 : vector<2x256xi1>, vector<2x256xf32>
    %c0_13 = arith.constant 0 : index
    %c0_14 = arith.constant 0 : index
    %c0_15 = arith.constant 0 : index
    %37 = vector.load %arg6[%c0_13, %c0_14, %c0_15] : memref<1x2x128xf32, #tpu.memory_space<vmem>>, vector<1x2x128xf32>
    %38 = vector.extract_strided_slice %36 {offsets = [0, 0], sizes = [2, 128], strides = [1, 1]} : vector<2x256xf32> to vector<2x128xf32>
    %39 = vector.extract_strided_slice %36 {offsets = [0, 128], sizes = [2, 128], strides = [1, 1]} : vector<2x256xf32> to vector<2x128xf32>
    %40 = arith.addf %38, %39 : vector<2x128xf32>
    %41 = vector.shape_cast %40 : vector<2x128xf32> to vector<1x2x128xf32>
    %42 = arith.addf %37, %41 : vector<1x2x128xf32>
    %c0_16 = arith.constant 0 : index
    %c0_17 = arith.constant 0 : index
    %c0_18 = arith.constant 0 : index
    %43 = vector.load %arg6[%c0_16, %c0_17, %c0_18] : memref<1x2x128xf32, #tpu.memory_space<vmem>>, vector<1x2x128xf32>
    tpu.vector_store %arg6[%c0_16, %c0_17, %c0_18], %42 {strides = array<i32>} : memref<1x2x128xf32, #tpu.memory_space<vmem>>, vector<1x2x128xf32>,
    return
  }
  func.func @transform_0(%arg0: i32, %arg1: i32) -> (i32, i32) {
    %c0_i32 = arith.constant 0 : i32
    %c0_i32_0 = arith.constant 0 : i32
    return %arg0, %c0_i32 : i32, i32
  }
  func.func @transform_1(%arg0: i32, %arg1: i32) -> (i32, i32) {
    %c0_i32 = arith.constant 0 : i32
    %c0_i32_0 = arith.constant 0 : i32
    return %arg0, %c0_i32 : i32, i32
  }
  func.func @transform_2(%arg0: i32, %arg1: i32) -> (i32, i32) {
    %c0_i32 = arith.constant 0 : i32
    return %arg0, %arg1 : i32, i32
  }
  func.func @transform_3(%arg0: i32, %arg1: i32) -> (i32, i32) {
    %c0_i32 = arith.constant 0 : i32
    return %arg0, %arg1 : i32, i32
  }
  func.func @transform_4(%arg0: i32, %arg1: i32) -> (i32, i32, i32) {
    %c0_i32 = arith.constant 0 : i32
    %c0_i32_0 = arith.constant 0 : i32
    %c0_i32_1 = arith.constant 0 : i32
    return %arg0, %c0_i32, %c0_i32_0 : i32, i32, i32
  }
}

</mosaic_0001>

<llo_original>
// kernel: tpu_custom_call.1
$region0: #{tpu_custom_call.1}
  #allocation0 [shape = 'u32[]', space=smem, size = 0x4, offset = 0x4, fixed_abs, tag = 'smem constant byte address 0x4 - core index']
  #allocation1 [shape = 'u32[144,128]{1,0:T(1,128)}', space=vmem, size = 0x12000, scoped, tag = 'internal scratch']
  %s0 = inlined_call_operand.vmem [shape: s32[2,1], index: 0, kind: input, shape index: {}]
  %s1 = inlined_call_operand.vmem [shape: s32[2,1], index: 1, kind: input, shape index: {}]
  %s2 = inlined_call_operand.vmem [shape: f32[2,256], index: 2, kind: input, shape index: {}]
  %s3 = inlined_call_operand.vmem [shape: f32[2,256], index: 3, kind: input, shape index: {}]
  %s4 = inlined_call_operand.hbm [shape: f32[1,2,128], index: 4, kind: output, shape index: {}]
  %s5 = sld [smem:[#allocation0]]
  $region30: #{tpu_custom_call.1} parent=0
    _
  %s7 = ssub.s32 1, %s5
  %s8 = scalar_select 0, %s7, %s5
  $region1: #{tpu_custom_call.1} parent=0
    #allocation2 [shape = 'u8[1024]{0}', space=vmem, size = 0x400, scoped, tag = 'output window, operand 0, single buffered']
    #allocation3 [shape = 's32[1]{0}', space=sflag, size = 0x4, scoped, tag = 'scoped memory for tpu_custom_call.1']
    %9 = vsyncpa [#allocation3], 0
    // Predicated region
    $region2: #{tpu_custom_call.1} parent=1 // pred_check
      _
    $region3: #{tpu_custom_call.1} parent=1 // pred_check_branch
      %11 = sbr.rel (0) target = $region5
    $region4: #{tpu_custom_call.1} parent=1 // pred_region
      _
    $region5: #{tpu_custom_call.1} parent=1 // pred_fallthru
      _
    // Predicated region
    $region6: #{tpu_custom_call.1} parent=1 // pred_check
      _
    $region7: #{tpu_custom_call.1} parent=1 // pred_check_branch
      %13 = sbr.rel (0) target = $region9
    $region8: #{tpu_custom_call.1} parent=1 // pred_region
      _
    $region9: #{tpu_custom_call.1} parent=1 // pred_fallthru
      _
    // Predicated region
    $region10: #{tpu_custom_call.1} parent=1 // pred_check
      _
    $region11: #{tpu_custom_call.1} parent=1 // pred_check_branch
      %15 = sbr.rel (0) target = $region13
    $region12: #{tpu_custom_call.1} parent=1 // pred_region
      _
    $region13: #{tpu_custom_call.1} parent=1 // pred_fallthru
      _
    // Predicated region
    $region14: #{tpu_custom_call.1} parent=1 // pred_check
      _
    $region15: #{tpu_custom_call.1} parent=1 // pred_check_branch
      %17 = sbr.rel (0) target = $region17
    $region16: #{tpu_custom_call.1} parent=1 // pred_region
      _
    $region17: #{tpu_custom_call.1} parent=1 // pred_fallthru
      _
    %v18 = vld [vmem:[%s2] sm:$0xf]
    %v19 = vlaneseq
    %v20 = vand.u32 %v19, 127
    %v21 = vadd.s32 %v20, 128
    %s22 = smul.u32 0, 256
    %v23 = vstv %s22
    %v24 = vadd.s32 %v20, %v23
    %v25 = vadd.s32 %v21, %v23
    %v26 = vshra.s32 %v24, 4
    %v27 = vshra.s32 %v25, 4
    %v28 = vand.u32 %v24, 15
    %v29 = vand.u32 %v25, 15
    %v30 = vld [vmem:[%s0] sm:$0x3]
    %31 = vset.pattern.permute.xlu0 0
    %32 = vperm.xlu0 %31, %v30
    %v33 = vpop.permute.xlu0 %32
    %vm34 = vcmp.lt.s32.totalorder %v26, %v33
    %vm35 = vcmp.lt.s32.totalorder %v27, %v33
    %v36 = vld [vmem:[%s1] sm:$0x3]
    %37 = vset.pattern.permute.xlu0 0
    %38 = vperm.xlu0 %37, %v36
    %v39 = vpop.permute.xlu0 %38
    %vm40 = vcmp.lt.s32.totalorder %v28, %v39
    %vm41 = vcmp.lt.s32.totalorder %v29, %v39
    %vm42 = vmand %vm34, %vm40
    %vm43 = vmand %vm35, %vm41
    %v44 = vld [vmem:[%s3] sm:$0xf]
    %p45 = scmp.eq.s32.totalorder 0, 0
    // Predicated region
    $region18: #{tpu_custom_call.1} parent=1 // pred_check
      %p46 = pneg %p45
    $region19: #{tpu_custom_call.1} parent=1 // pred_check_branch
      %48 = sbr.rel (%p46) target = $region21
    $region20: #{tpu_custom_call.1} parent=1 // pred_region
      %49 = vst [vmem:[#allocation2] sm:$0x3] 0.0
    $region21: #{tpu_custom_call.1} parent=1 // pred_fallthru
      _
    %v50 = vadd.f32 %v18, 1e-15
    %v51 = vlog2.pop %v50
    %v52 = vmul.f32 %v51, 0.6931472
    %v53 = vsub.f32 1.0, %v18
    %v54 = vadd.f32 %v53, 1e-15
    %v55 = vlog2.pop %v54
    %v56 = vmul.f32 %v55, 0.6931472
    %v57 = vmul.f32 %v44, %v52
    %v58 = vsub.f32 1.0, %v44
    %v59 = vmul.f32 %v58, %v56
    %v60 = vadd.f32 %v57, %v59
    %v61 = vsub.f32 0.0, %v60
    %v64 = vunpack.c.l.s4 1983009808
    %v65 = vunpack.c.0.s8 %v64
    %v66 = vlaneseq
    %v67 = vshrl.u32 %v66, 7
    %v68 = vsub.s32 %v65, %v67
    %v69 = vrot.slane %v61, %v68
    %v70 = vcombine.high %v69, %v69
    %v73 = vsel %vm42, %v69, 0.0
    %v74 = vsel %vm43, %v70, 0.0
    %v75 = vld [vmem:[#allocation2] sm:$0x3]
    %v76 = vadd.f32 %v73, %v74
    %v77 = vadd.f32 %v75, %v76
    %78 = vst [vmem:[#allocation2] sm:$0x3] %v77
    // Predicated region
    $region22: #{tpu_custom_call.1} parent=1 // pred_check
      _
    $region23: #{tpu_custom_call.1} parent=1 // pred_check_branch
      %80 = sbr.rel (0) target = $region25
    $region24: #{tpu_custom_call.1} parent=1 // pred_region
      %s82 = ssub.s32 32, 32
      %83 = vsyncadd [#allocation3], %s82
      %s85 = sshll.u32 [#allocation2], 4
      %s86 = int_to_ptr.vmem [resolvable:$true] %s85
      %88 = dma.vmem_to_hbm [thread:$0]  %s86, 32, %s4, [#allocation3]
    $region25: #{tpu_custom_call.1} parent=1 // pred_fallthru
      _
    // Predicated region
    $region26: #{tpu_custom_call.1} parent=1 // pred_check
      _
    $region27: #{tpu_custom_call.1} parent=1 // pred_check_branch
      %90 = sbr.rel (0) target = $region29
    $region28: #{tpu_custom_call.1} parent=1 // pred_region
      %91 = dma.done [#allocation3], 32
    $region29: #{tpu_custom_call.1} parent=1 // pred_fallthru
      _
    %92 = vsyncpa [#allocation3], 1

</llo_original>
